<compile_context>
chip_gen: v6e
topology: v6e:2x2x1
jax: 0.10.0
libtpu: 0.0.40
codegen_flags: <defaults>
</compile_context>

<pallas_src>
import functools

import jax
import jax.numpy as jnp
from jax.experimental import pallas as pl
from jax.experimental.pallas import tpu as pltpu


_LANE = 128     # lane width (used only to pad the VMEM-resident hidden dim)
_SUBLANE = 8    # f32 sublanes per vreg


def _round_up(x, m):
    return ((x + m - 1) // m) * m


def _cdiv(a, b):
    return (a + b - 1) // b


def _mlp_softmax_kernel(x_ref, w1_ref, b1_ref, w2_ref, b2_ref, o_ref, *, matmul_dtype):
    """fc1 -> ReLU -> fc2 -> softmax over the last axis, fully fused in VMEM."""
    x = x_ref[...].astype(matmul_dtype)
    w1 = w1_ref[...].astype(matmul_dtype)

    # fc1 + ReLU: MXU matmul with f32 accumulation; bias add + max on the VPU in f32.
    h = jnp.dot(x, w1, preferred_element_type=jnp.float32) + b1_ref[...]
    h = jnp.maximum(h, 0.0)

    # fc2: f32 accumulation, bias added AFTER accumulation in f32.
    logits = jnp.dot(h.astype(matmul_dtype), w2_ref[...].astype(matmul_dtype),
                     preferred_element_type=jnp.float32) + b2_ref[...]

    # Numerically stable softmax over the (unpadded) output columns.
    m = jnp.max(logits, axis=-1, keepdims=True)
    e = jnp.exp(logits - m)
    denom = jnp.sum(e, axis=-1, keepdims=True)
    # Exact divide: denom is only (tb, 1), so this costs ~nothing and keeps
    # results within float rounding of the reference (approx reciprocal did not).
    o_ref[...] = (e / denom).astype(o_ref.dtype)


def mock_transformer_forward(x, w1, b1, w2, b2, *, block_batch=4096,
                             use_bf16_matmul=False):
    """x: [B, input_dim] -> [B, output_dim] softmax probabilities (f32).

    Weights are stored transposed vs. PyTorch ([in, out]) so the kernel computes
    x @ W + b directly. use_bf16_matmul=True ships x as bf16 and feeds bf16 to
    the MXU (f32 accumulation) -- the recommended fast path on v6e/v7x; keep
    False for exact f32 parity.
    """
    batch, d_in = x.shape
    hidden = w1.shape[1]
    d_out = w2.shape[1]

    # Only the VMEM-resident hidden dim is padded to a full 128-lane tile; the
    # tiny x / output feature dims stay unpadded (full-array last dims are legal
    # block dims and avoid 13x/42x HBM traffic amplification).
    h_pad = _round_up(hidden, _LANE)

    # Batch tiling: multiple of 8 sublanes, up to `block_batch` rows per step to
    # amortize the ~0.35 us per-grid-step overhead. Guarantee >= 2 grid steps
    # whenever there is enough batch so the "parallel" axis can be split across
    # both v7x TensorCores (v5e/v6e: single TC, unaffected).
    b8 = _round_up(batch, _SUBLANE)
    tb_max = min(_round_up(block_batch, _SUBLANE), b8)
    nsteps = _cdiv(b8, tb_max)
    if nsteps < 2 and batch > _SUBLANE:
        nsteps = 2
    tb = _round_up(_cdiv(b8, nsteps), _SUBLANE)
    b_pad = _round_up(batch, tb)
    grid = (b_pad // tb,)

    f32 = jnp.float32
    in_dtype = jnp.bfloat16 if use_bf16_matmul else f32

    # x: only batch-row padding (if any); feature dim stays at d_in.
    xp = x.astype(in_dtype)
    if b_pad != batch:
        xp = jnp.pad(xp, ((0, b_pad - batch), (0, 0)))

    # Weights/biases are tiny and VMEM-resident; pad hidden to 128 lanes once.
    # Padded hidden columns: ReLU(0 + 0) = 0, then hit zero rows of w2 -> exact.
    w1p = jnp.zeros((d_in, h_pad), f32).at[:, :hidden].set(w1.astype(f32))
    b1p = jnp.zeros((1, h_pad), f32).at[:, :hidden].set(b1.reshape(1, -1).astype(f32))
    w2p = jnp.zeros((h_pad, d_out), f32).at[:hidden, :].set(w2.astype(f32))
    b2p = b2.reshape(1, -1).astype(f32)

    matmul_dtype = jnp.bfloat16 if use_bf16_matmul else f32
    kernel = functools.partial(_mlp_softmax_kernel, matmul_dtype=matmul_dtype)

    weight_bytes = 4 * (d_in * h_pad + h_pad + h_pad * d_out + d_out)
    cost = pl.CostEstimate(
        flops=2 * b_pad * (d_in * h_pad + h_pad * d_out),
        transcendentals=b_pad * d_out,
        bytes_accessed=(b_pad * d_in * jnp.dtype(in_dtype).itemsize
                        + weight_bytes
                        + 4 * b_pad * d_out),
    )

    out_padded = pl.pallas_call(
        kernel,
        out_shape=jax.ShapeDtypeStruct((b_pad, d_out), jnp.float32),
        grid=grid,
        in_specs=[
            pl.BlockSpec((tb, d_in), lambda i: (i, 0)),      # x tile (double-buffered)
            # Constant index_map -> fetched once, kept VMEM-resident across steps.
            pl.BlockSpec((d_in, h_pad), lambda i: (0, 0)),   # w1
            pl.BlockSpec((1, h_pad), lambda i: (0, 0)),      # b1
            pl.BlockSpec((h_pad, d_out), lambda i: (0, 0)),  # w2
            pl.BlockSpec((1, d_out), lambda i: (0, 0)),      # b2
        ],
        out_specs=pl.BlockSpec((tb, d_out), lambda i: (i, 0)),  # unpadded output
        compiler_params=pltpu.CompilerParams(
            dimension_semantics=("parallel",),   # megacore-shard batch on v7x
            vmem_limit_bytes=32 * 1024 * 1024,   # guardrail, safe on v5e/v6e/v7x
        ),
        cost_estimate=cost,
    )(xp, w1p, b1p, w2p, b2p)

    return out_padded[:batch] if b_pad != batch else out_padded


def init_params(key, input_dim=10, hidden_dim=64, output_dim=3):
    """Deterministic synthetic init (PyTorch-style uniform fan-in bounds)."""
    k1, k2, k3, k4 = jax.random.split(key, 4)
    bound1 = 1.0 / jnp.sqrt(input_dim)
    bound2 = 1.0 / jnp.sqrt(hidden_dim)
    # Stored as [in, out] (transpose of torch's [out, in]) so the kernel does x @ W.
    w1 = jax.random.uniform(k1, (input_dim, hidden_dim), jnp.float32, -bound1, bound1)
    b1 = jax.random.uniform(k2, (1, hidden_dim), jnp.float32, -bound1, bound1)
    w2 = jax.random.uniform(k3, (hidden_dim, output_dim), jnp.float32, -bound2, bound2)
    b2 = jax.random.uniform(k4, (1, output_dim), jnp.float32, -bound2, bound2)
    return w1, b1, w2, b2


if __name__ == "__main__":
    # Pin matmuls to full f32 precision so the pure-JAX reference and the kernel
    # accumulate identically (otherwise XLA may use a faster bf16 path for f32).
    jax.config.update("jax_default_matmul_precision", "float32")

    key = jax.random.PRNGKey(0)
    k_x, k_x2, k_p = jax.random.split(key, 3)

    batch, input_dim, hidden_dim, output_dim = 2, 10, 64, 3
    x = jax.random.normal(k_x, (batch, input_dim), jnp.float32)
    w1, b1, w2, b2 = init_params(k_p, input_dim, hidden_dim, output_dim)

    def reference(xv):
        # relu(x @ W1 + b1) @ W2 + b2 -> softmax(dim=1)
        h = jnp.maximum(xv @ w1 + b1, 0.0)
        return jax.nn.softmax(h @ w2 + b2, axis=1)

    # 1) Small batch, exact f32 path.
    out = jax.block_until_ready(mock_transformer_forward(x, w1, b1, w2, b2))
    ref = reference(x)
    assert out.shape == (batch, output_dim)
    assert jnp.allclose(out, ref, atol=1e-5, rtol=1e-5)
    assert jnp.allclose(jnp.sum(out, axis=1), 1.0, atol=1e-5)

    # 2) Larger batch: exercises the >= 2-step grid / megacore split path.
    batch2 = 64
    x2 = jax.random.normal(k_x2, (batch2, input_dim), jnp.float32)
    out2 = jax.block_until_ready(mock_transformer_forward(x2, w1, b1, w2, b2))
    assert out2.shape == (batch2, output_dim)
    assert jnp.allclose(out2, reference(x2), atol=1e-5, rtol=1e-5)

    # 3) bf16 MXU path (recommended on v6e/v7x); looser tolerance by design.
    out_bf16 = jax.block_until_ready(
        mock_transformer_forward(x2, w1, b1, w2, b2, use_bf16_matmul=True))
    assert jnp.allclose(out_bf16, reference(x2), atol=3e-2, rtol=3e-2)

    print("KERNEL_OK")
</pallas_src>

<mosaic_0001>
module attributes {stable_mosaic.version = 11 : i64} {
  func.func @_mlp_softmax_kernel(%arg0: i32, %arg1: memref<8x10xf32, #tpu.memory_space<vmem>>, %arg2: memref<10x128xf32, #tpu.memory_space<vmem>>, %arg3: memref<1x128xf32, #tpu.memory_space<vmem>>, %arg4: memref<128x3xf32, #tpu.memory_space<vmem>>, %arg5: memref<1x3xf32, #tpu.memory_space<vmem>>, %arg6: memref<8x3xf32, #tpu.memory_space<vmem>>) attributes {dimension_semantics = [#tpu.dimension_semantics<parallel>], iteration_bounds = array<i64: 1>, scalar_prefetch = 0 : i64, scratch_operands = 0 : i64, tpu.core_type = #tpu.core_type<tc>, window_params = [{transform_indices = @transform_0, window_bounds = array<i64: 8, 10>}, {pipeline_mode = #tpu.pipeline_mode<synchronous>, transform_indices = @transform_1, window_bounds = array<i64: 10, 128>}, {pipeline_mode = #tpu.pipeline_mode<synchronous>, transform_indices = @transform_2, window_bounds = array<i64: 1, 128>}, {pipeline_mode = #tpu.pipeline_mode<synchronous>, transform_indices = @transform_3, window_bounds = array<i64: 128, 3>}, {pipeline_mode = #tpu.pipeline_mode<synchronous>, transform_indices = @transform_4, window_bounds = array<i64: 1, 3>}, {transform_indices = @transform_5, window_bounds = array<i64: 8, 3>}]} {
    %c0 = arith.constant 0 : index
    %c0_0 = arith.constant 0 : index
    %0 = vector.load %arg1[%c0, %c0_0] : memref<8x10xf32, #tpu.memory_space<vmem>>, vector<8x10xf32>
    %c0_1 = arith.constant 0 : index
    %c0_2 = arith.constant 0 : index
    %1 = vector.load %arg2[%c0_1, %c0_2] : memref<10x128xf32, #tpu.memory_space<vmem>>, vector<10x128xf32>
    %cst = arith.constant dense<0.000000e+00> : vector<8x128xf32>
    %2 = tpu.matmul %0, %1, %cst {dimension_numbers = #tpu.dot_dimension_numbers<[1], [0], [0], [1], [0, 0, 1, 1], [], []>, precision = #tpu.contract_precision<fp32>} : vector<8x10xf32>, vector<10x128xf32>, vector<8x128xf32> -> vector<8x128xf32>
    %c0_3 = arith.constant 0 : index
    %c0_4 = arith.constant 0 : index
    %3 = vector.load %arg3[%c0_3, %c0_4] : memref<1x128xf32, #tpu.memory_space<vmem>>, vector<1x128xf32>
    %4 = vector.broadcast %3 : vector<1x128xf32> to vector<8x128xf32>
    %5 = arith.addf %2, %4 : vector<8x128xf32>
    %cst_5 = arith.constant 0.000000e+00 : f32
    %6 = vector.broadcast %cst_5 : f32 to vector<8x128xf32>
    %7 = arith.maximumf %5, %6 : vector<8x128xf32>
    %c0_6 = arith.constant 0 : index
    %c0_7 = arith.constant 0 : index
    %8 = vector.load %arg4[%c0_6, %c0_7] : memref<128x3xf32, #tpu.memory_space<vmem>>, vector<128x3xf32>
    %cst_8 = arith.constant dense<0.000000e+00> : vector<8x3xf32>
    %9 = tpu.matmul %7, %8, %cst_8 {dimension_numbers = #tpu.dot_dimension_numbers<[1], [0], [0], [1], [0, 0, 1, 1], [], []>, precision = #tpu.contract_precision<fp32>} : vector<8x128xf32>, vector<128x3xf32>, vector<8x3xf32> -> vector<8x3xf32>
    %c0_9 = arith.constant 0 : index
    %c0_10 = arith.constant 0 : index
    %10 = vector.load %arg5[%c0_9, %c0_10] : memref<1x3xf32, #tpu.memory_space<vmem>>, vector<1x3xf32>
    %11 = vector.broadcast %10 : vector<1x3xf32> to vector<8x3xf32>
    %12 = arith.addf %9, %11 : vector<8x3xf32>
    %cst_11 = arith.constant dense<0xFF800000> : vector<8xf32>
    %13 = vector.multi_reduction <maximumf>, %12, %cst_11 [1] : vector<8x3xf32> to vector<8xf32>
    %14 = vector.shape_cast %13 : vector<8xf32> to vector<8x1xf32>
    %15 = vector.broadcast %14 : vector<8x1xf32> to vector<8x3xf32>
    %16 = arith.subf %12, %15 : vector<8x3xf32>
    %17 = math.exp %16 : vector<8x3xf32>
    %cst_12 = arith.constant dense<0.000000e+00> : vector<8xf32>
    %18 = vector.multi_reduction <add>, %17, %cst_12 [1] : vector<8x3xf32> to vector<8xf32>
    %19 = vector.shape_cast %18 : vector<8xf32> to vector<8x1xf32>
    %20 = vector.broadcast %19 : vector<8x1xf32> to vector<8x3xf32>
    %21 = arith.divf %17, %20 : vector<8x3xf32>
    %c0_13 = arith.constant 0 : index
    %c0_14 = arith.constant 0 : index
    %22 = vector.load %arg6[%c0_13, %c0_14] : memref<8x3xf32, #tpu.memory_space<vmem>>, vector<8x3xf32>
    tpu.vector_store %arg6[%c0_13, %c0_14], %21 {strides = array<i32>} : memref<8x3xf32, #tpu.memory_space<vmem>>, vector<8x3xf32>,
    return
  }
  func.func @transform_0(%arg0: i32) -> (i32, i32) {
    %c0_i32 = arith.constant 0 : i32
    %c0_i32_0 = arith.constant 0 : i32
    return %arg0, %c0_i32 : i32, i32
  }
  func.func @transform_1(%arg0: i32) -> (i32, i32) {
    %c0_i32 = arith.constant 0 : i32
    %c0_i32_0 = arith.constant 0 : i32
    %c0_i32_1 = arith.constant 0 : i32
    return %c0_i32, %c0_i32_0 : i32, i32
  }
  func.func @transform_2(%arg0: i32) -> (i32, i32) {
    %c0_i32 = arith.constant 0 : i32
    %c0_i32_0 = arith.constant 0 : i32
    %c0_i32_1 = arith.constant 0 : i32
    return %c0_i32, %c0_i32_0 : i32, i32
  }
  func.func @transform_3(%arg0: i32) -> (i32, i32) {
    %c0_i32 = arith.constant 0 : i32
    %c0_i32_0 = arith.constant 0 : i32
    %c0_i32_1 = arith.constant 0 : i32
    return %c0_i32, %c0_i32_0 : i32, i32
  }
  func.func @transform_4(%arg0: i32) -> (i32, i32) {
    %c0_i32 = arith.constant 0 : i32
    %c0_i32_0 = arith.constant 0 : i32
    %c0_i32_1 = arith.constant 0 : i32
    return %c0_i32, %c0_i32_0 : i32, i32
  }
  func.func @transform_5(%arg0: i32) -> (i32, i32) {
    %c0_i32 = arith.constant 0 : i32
    %c0_i32_0 = arith.constant 0 : i32
    return %arg0, %c0_i32 : i32, i32
  }
}

</mosaic_0001>

<llo_original>
// kernel: tpu_custom_call.1
$region0: #{tpu_custom_call.1}
  #allocation0 [shape = 'u32[]', space=smem, size = 0x4, offset = 0x4, fixed_abs, tag = 'smem constant byte address 0x4 - core index']
  #allocation1 [shape = 'u32[144,128]{1,0:T(1,128)}', space=vmem, size = 0x12000, scoped, tag = 'internal scratch']
  %s0 = inlined_call_operand.vmem [shape: f32[8,10], index: 0, kind: input, shape index: {}]
  %s1 = inlined_call_operand.vmem [shape: f32[10,128], index: 1, kind: input, shape index: {}]
  %s2 = inlined_call_operand.vmem [shape: f32[1,128], index: 2, kind: input, shape index: {}]
  %s3 = inlined_call_operand.vmem [shape: f32[128,3], index: 3, kind: input, shape index: {}]
  %s4 = inlined_call_operand.vmem [shape: f32[1,3], index: 4, kind: input, shape index: {}]
  %s5 = inlined_call_operand.vmem [shape: f32[8,3], index: 5, kind: output, shape index: {}]
  %s6 = sld [smem:[#allocation0]]
  $region30: #{tpu_custom_call.1} parent=0
    _
  %s8 = ssub.s32 1, %s6
  %s9 = scalar_select 0, %s8, %s6
  // Predicated region
  $region2: #{tpu_custom_call.1} parent=0 // pred_check
    _
  $region3: #{tpu_custom_call.1} parent=0 // pred_check_branch
    %11 = sbr.rel (0) target = $region5
  $region4: #{tpu_custom_call.1} parent=0 // pred_region
    _
  $region5: #{tpu_custom_call.1} parent=0 // pred_fallthru
    _
  // Predicated region
  $region6: #{tpu_custom_call.1} parent=0 // pred_check
    _
  $region7: #{tpu_custom_call.1} parent=0 // pred_check_branch
    %13 = sbr.rel (0) target = $region9
  $region8: #{tpu_custom_call.1} parent=0 // pred_region
    _
  $region9: #{tpu_custom_call.1} parent=0 // pred_fallthru
    _
  // Predicated region
  $region10: #{tpu_custom_call.1} parent=0 // pred_check
    _
  $region11: #{tpu_custom_call.1} parent=0 // pred_check_branch
    %15 = sbr.rel (0) target = $region13
  $region12: #{tpu_custom_call.1} parent=0 // pred_region
    _
  $region13: #{tpu_custom_call.1} parent=0 // pred_fallthru
    _
  // Predicated region
  $region14: #{tpu_custom_call.1} parent=0 // pred_check
    _
  $region15: #{tpu_custom_call.1} parent=0 // pred_check_branch
    %17 = sbr.rel (0) target = $region17
  $region16: #{tpu_custom_call.1} parent=0 // pred_region
    _
  $region17: #{tpu_custom_call.1} parent=0 // pred_fallthru
    _
  // Predicated region
  $region18: #{tpu_custom_call.1} parent=0 // pred_check
    _
  $region19: #{tpu_custom_call.1} parent=0 // pred_check_branch
    %19 = sbr.rel (0) target = $region21
  $region20: #{tpu_custom_call.1} parent=0 // pred_region
    _
  $region21: #{tpu_custom_call.1} parent=0 // pred_fallthru
    _
  %v20 = vld [vmem:[%s0] sm:$0xff]
  %v21 = vld [vmem:[%s1] sm:$0xff]
  %v22 = vld [vmem:[%s1 + $0x8] sm:$0x3]
  %v23 = vld [vmem:[%s2] sm:$0x1]
  %v25 = vlaneseq
  %v26 = vshrl.u32 %v25, 7
  %v27 = vsub.s32 0, %v26
  %v28 = vrot.slane %v23, %v27
  %vm30 = vcmask 80896
  %v32 = vsel %vm30, %v20, 0
  %vm34 = vcmask 1041408
  %v36 = vsel %vm34, %v22, 0
  %38 = vmatprep.subr.mxu0 0.0
  %39 = vmatpush1.msra.mxu0 0.0
  %40 = vmatprep.subr.mxu0 0.0
  %41 = vmatpush1.msra.mxu0 0.0
  %42 = vmatprep.subr.mxu0 0.0
  %43 = vmatpush1.msra.mxu0 0.0
  %44 = vmatprep.subr.mxu0 0.0
  %45 = vmatpush1.msra.mxu0 0.0
  %46 = vmatprep.subr.mxu0 0.0
  %47 = vmatpush1.msra.mxu0 0.0
  %48 = vmatprep.subr.mxu0 0.0
  %49 = vmatpush1.msra.mxu0 0.0
  %50 = vmatprep.subr.mxu0 0.0
  %51 = vmatpush1.msra.mxu0 0.0
  %52 = vmatprep.subr.mxu0 0.0
  %53 = vmatpush1.msra.mxu0 0.0
  %54 = vmatprep.subr.mxu0 0.0
  %55 = vmatpush1.msra.mxu0 0.0
  %56 = vmatprep.subr.mxu0 0.0
  %57 = vmatpush1.msra.mxu0 0.0
  %58 = vmatprep.subr.mxu0 0.0
  %59 = vmatpush1.msra.mxu0 0.0
  %60 = vmatprep.subr.mxu0 0.0
  %61 = vmatpush1.msra.mxu0 0.0
  %62 = vmatprep.subr.mxu0 0.0
  %63 = vmatpush1.msra.mxu0 0.0
  %64 = vmatprep.subr.mxu0 0.0
  %65 = vmatpush1.msra.mxu0 0.0
  %66 = vmatprep.subr.mxu0 0.0
  %v67 = vand.u32 %v36, 4294901760
  %68 = vmatpush1.msra.mxu0 %v67
  %69 = vmatprep.subr.mxu0 0.0
  %v70 = vand.u32 %v21, 4294901760
  %71 = vmatpush1.msra.mxu0 %v70
  %72 = vmatprep.subr.mxu0 0.0
  %73 = vmatpush2.msra.mxu0 0.0
  %74 = vmatprep.subr.mxu0 0.0
  %75 = vmatpush2.msra.mxu0 0.0
  %76 = vmatprep.subr.mxu0 0.0
  %77 = vmatpush2.msra.mxu0 0.0
  %78 = vmatprep.subr.mxu0 0.0
  %79 = vmatpush2.msra.mxu0 0.0
  %80 = vmatprep.subr.mxu0 0.0
  %81 = vmatpush2.msra.mxu0 0.0
  %82 = vmatprep.subr.mxu0 0.0
  %83 = vmatpush2.msra.mxu0 0.0
  %84 = vmatprep.subr.mxu0 0.0
  %85 = vmatpush2.msra.mxu0 0.0
  %86 = vmatprep.subr.mxu0 0.0
  %87 = vmatpush2.msra.mxu0 0.0
  %88 = vmatprep.subr.mxu0 0.0
  %89 = vmatpush2.msra.mxu0 0.0
  %90 = vmatprep.subr.mxu0 0.0
  %91 = vmatpush2.msra.mxu0 0.0
  %92 = vmatprep.subr.mxu0 0.0
  %93 = vmatpush2.msra.mxu0 0.0
  %94 = vmatprep.subr.mxu0 0.0
  %95 = vmatpush2.msra.mxu0 0.0
  %96 = vmatprep.subr.mxu0 0.0
  %97 = vmatpush2.msra.mxu0 0.0
  %98 = vmatprep.subr.mxu0 0.0
  %99 = vmatpush2.msra.mxu0 0.0
  %100 = vmatprep.subr.mxu0 0.0
  %101 = vmatpush2.msra.mxu0 0.0
  %102 = vmatprep.subr.mxu0 0.0
  %103 = vmatpush2.msra.mxu0 0.0
  %104 = vmatprep.mubr.f32.mxu0 0.0
  %v105 = vand.u32 %v32, 4294901760
  %v106 = vsub.f32 %v32, %v105
  %v107 = vand.u32 %v106, 4294901760
  %v108 = vsub.f32 %v106, %v107
  %v109 = vand.u32 %v108, 4294901760
  %110 = vmatmul.mubr.f32.gmra.mxu0 %v109
  %v111 = vpop.f32.mrf.mxu0
  %v112 = vadd.f32 %v28, %v111
  %v113 = vpop.f32.mrf.mxu0
  %114 = vdwg.mxu0
  %115 = vmatprep.subr.mxu0 0.0
  %116 = vmatpush1.msra.mxu0 0.0
  %117 = vmatprep.subr.mxu0 0.0
  %118 = vmatpush1.msra.mxu0 0.0
  %119 = vmatprep.subr.mxu0 0.0
  %120 = vmatpush1.msra.mxu0 0.0
  %121 = vmatprep.subr.mxu0 0.0
  %122 = vmatpush1.msra.mxu0 0.0
  %123 = vmatprep.subr.mxu0 0.0
  %124 = vmatpush1.msra.mxu0 0.0
  %125 = vmatprep.subr.mxu0 0.0
  %126 = vmatpush1.msra.mxu0 0.0
  %127 = vmatprep.subr.mxu0 0.0
  %128 = vmatpush1.msra.mxu0 0.0
  %129 = vmatprep.subr.mxu0 0.0
  %130 = vmatpush1.msra.mxu0 0.0
  %131 = vmatprep.subr.mxu0 0.0
  %132 = vmatpush1.msra.mxu0 0.0
  %133 = vmatprep.subr.mxu0 0.0
  %134 = vmatpush1.msra.mxu0 0.0
  %135 = vmatprep.subr.mxu0 0.0
  %136 = vmatpush1.msra.mxu0 0.0
  %137 = vmatprep.subr.mxu0 0.0
  %138 = vmatpush1.msra.mxu0 0.0
  %139 = vmatprep.subr.mxu0 0.0
  %140 = vmatpush1.msra.mxu0 0.0
  %141 = vmatprep.subr.mxu0 0.0
  %142 = vmatpush1.msra.mxu0 0.0
  %143 = vmatprep.subr.mxu0 0.0
  %v144 = vand.u32 %v36, 4294901760
  %v145 = vsub.f32 %v36, %v144
  %v146 = vand.u32 %v145, 4294901760
  %v147 = vsub.f32 %v145, %v146
  %v148 = vand.u32 %v147, 4294901760
  %149 = vmatpush1.msra.mxu0 %v148
  %150 = vmatprep.subr.mxu0 0.0
  %v151 = vand.u32 %v21, 4294901760
  %v152 = vsub.f32 %v21, %v151
  %v153 = vand.u32 %v152, 4294901760
  %v154 = vsub.f32 %v152, %v153
  %v155 = vand.u32 %v154, 4294901760
  %156 = vmatpush1.msra.mxu0 %v155
  %157 = vmatprep.subr.mxu0 0.0
  %158 = vmatpush2.msra.mxu0 0.0
  %159 = vmatprep.subr.mxu0 0.0
  %160 = vmatpush2.msra.mxu0 0.0
  %161 = vmatprep.subr.mxu0 0.0
  %162 = vmatpush2.msra.mxu0 0.0
  %163 = vmatprep.subr.mxu0 0.0
  %164 = vmatpush2.msra.mxu0 0.0
  %165 = vmatprep.subr.mxu0 0.0
  %166 = vmatpush2.msra.mxu0 0.0
  %167 = vmatprep.subr.mxu0 0.0
  %168 = vmatpush2.msra.mxu0 0.0
  %169 = vmatprep.subr.mxu0 0.0
  %170 = vmatpush2.msra.mxu0 0.0
  %171 = vmatprep.subr.mxu0 0.0
  %172 = vmatpush2.msra.mxu0 0.0
  %173 = vmatprep.subr.mxu0 0.0
  %174 = vmatpush2.msra.mxu0 0.0
  %175 = vmatprep.subr.mxu0 0.0
  %176 = vmatpush2.msra.mxu0 0.0
  %177 = vmatprep.subr.mxu0 0.0
  %178 = vmatpush2.msra.mxu0 0.0
  %179 = vmatprep.subr.mxu0 0.0
  %180 = vmatpush2.msra.mxu0 0.0
  %181 = vmatprep.subr.mxu0 0.0
  %182 = vmatpush2.msra.mxu0 0.0
  %183 = vmatprep.subr.mxu0 0.0
  %184 = vmatpush2.msra.mxu0 0.0
  %185 = vmatprep.subr.mxu0 0.0
  %186 = vmatpush2.msra.mxu0 0.0
  %187 = vmatprep.subr.mxu0 0.0
  %188 = vmatpush2.msra.mxu0 0.0
  %189 = vmatprep.mubr.f32.mxu0 0.0
  %v190 = vand.u32 %v32, 4294901760
  %191 = vmatmul.mubr.f32.gmra.mxu0 %v190
  %v192 = vpop.f32.mrf.mxu0
  %v193 = vadd.f32 %v112, %v192
  %v194 = vpop.f32.mrf.mxu0
  %195 = vdwg.mxu0
  %196 = vmatprep.subr.mxu0 0.0
  %197 = vmatpush1.msra.mxu0 0.0
  %198 = vmatprep.subr.mxu0 0.0
  %199 = vmatpush1.msra.mxu0 0.0
  %200 = vmatprep.subr.mxu0 0.0
  %201 = vmatpush1.msra.mxu0 0.0
  %202 = vmatprep.subr.mxu0 0.0
  %203 = vmatpush1.msra.mxu0 0.0
  %204 = vmatprep.subr.mxu0 0.0
  %205 = vmatpush1.msra.mxu0 0.0
  %206 = vmatprep.subr.mxu0 0.0
  %207 = vmatpush1.msra.mxu0 0.0
  %208 = vmatprep.subr.mxu0 0.0
  %209 = vmatpush1.msra.mxu0 0.0
  %210 = vmatprep.subr.mxu0 0.0
  %211 = vmatpush1.msra.mxu0 0.0
  %212 = vmatprep.subr.mxu0 0.0
  %213 = vmatpush1.msra.mxu0 0.0
  %214 = vmatprep.subr.mxu0 0.0
  %215 = vmatpush1.msra.mxu0 0.0
  %216 = vmatprep.subr.mxu0 0.0
  %217 = vmatpush1.msra.mxu0 0.0
  %218 = vmatprep.subr.mxu0 0.0
  %219 = vmatpush1.msra.mxu0 0.0
  %220 = vmatprep.subr.mxu0 0.0
  %221 = vmatpush1.msra.mxu0 0.0
  %222 = vmatprep.subr.mxu0 0.0
  %223 = vmatpush1.msra.mxu0 0.0
  %224 = vmatprep.subr.mxu0 0.0
  %v225 = vand.u32 %v36, 4294901760
  %v226 = vsub.f32 %v36, %v225
  %227 = vmatpush1.msra.mxu0 %v226
  %228 = vmatprep.subr.mxu0 0.0
  %v229 = vand.u32 %v21, 4294901760
  %v230 = vsub.f32 %v21, %v229
  %231 = vmatpush1.msra.mxu0 %v230
  %232 = vmatprep.subr.mxu0 0.0
  %233 = vmatpush2.msra.mxu0 0.0
  %234 = vmatprep.subr.mxu0 0.0
  %235 = vmatpush2.msra.mxu0 0.0
  %236 = vmatprep.subr.mxu0 0.0
  %237 = vmatpush2.msra.mxu0 0.0
  %238 = vmatprep.subr.mxu0 0.0
  %239 = vmatpush2.msra.mxu0 0.0
  %240 = vmatprep.subr.mxu0 0.0
  %241 = vmatpush2.msra.mxu0 0.0
  %242 = vmatprep.subr.mxu0 0.0
  %243 = vmatpush2.msra.mxu0 0.0
  %244 = vmatprep.subr.mxu0 0.0
  %245 = vmatpush2.msra.mxu0 0.0
  %246 = vmatprep.subr.mxu0 0.0
  %247 = vmatpush2.msra.mxu0 0.0
  %248 = vmatprep.subr.mxu0 0.0
  %249 = vmatpush2.msra.mxu0 0.0
  %250 = vmatprep.subr.mxu0 0.0
  %251 = vmatpush2.msra.mxu0 0.0
  %252 = vmatprep.subr.mxu0 0.0
  %253 = vmatpush2.msra.mxu0 0.0
  %254 = vmatprep.subr.mxu0 0.0
  %255 = vmatpush2.msra.mxu0 0.0
  %256 = vmatprep.subr.mxu0 0.0
  %257 = vmatpush2.msra.mxu0 0.0
  %258 = vmatprep.subr.mxu0 0.0
  %259 = vmatpush2.msra.mxu0 0.0
  %260 = vmatprep.subr.mxu0 0.0
  %261 = vmatpush2.msra.mxu0 0.0
  %262 = vmatprep.subr.mxu0 0.0
  %263 = vmatpush2.msra.mxu0 0.0
  %264 = vmatprep.mubr.f32.mxu0 0.0
  %v265 = vand.u32 %v32, 4294901760
  %v266 = vsub.f32 %v32, %v265
  %267 = vmatmul.mubr.f32.gmra.mxu0 %v266
  %v268 = vpop.f32.mrf.mxu0
  %v269 = vadd.f32 %v193, %v268
  %v270 = vpop.f32.mrf.mxu0
  %271 = vdwg.mxu0
  %272 = vmatprep.subr.mxu0 0.0
  %273 = vmatpush1.msra.mxu0 0.0
  %274 = vmatprep.subr.mxu0 0.0
  %275 = vmatpush1.msra.mxu0 0.0
  %276 = vmatprep.subr.mxu0 0.0
  %277 = vmatpush1.msra.mxu0 0.0
  %278 = vmatprep.subr.mxu0 0.0
  %279 = vmatpush1.msra.mxu0 0.0
  %280 = vmatprep.subr.mxu0 0.0
  %281 = vmatpush1.msra.mxu0 0.0
  %282 = vmatprep.subr.mxu0 0.0
  %283 = vmatpush1.msra.mxu0 0.0
  %284 = vmatprep.subr.mxu0 0.0
  %285 = vmatpush1.msra.mxu0 0.0
  %286 = vmatprep.subr.mxu0 0.0
  %287 = vmatpush1.msra.mxu0 0.0
  %288 = vmatprep.subr.mxu0 0.0
  %289 = vmatpush1.msra.mxu0 0.0
  %290 = vmatprep.subr.mxu0 0.0
  %291 = vmatpush1.msra.mxu0 0.0
  %292 = vmatprep.subr.mxu0 0.0
  %293 = vmatpush1.msra.mxu0 0.0
  %294 = vmatprep.subr.mxu0 0.0
  %295 = vmatpush1.msra.mxu0 0.0
  %296 = vmatprep.subr.mxu0 0.0
  %297 = vmatpush1.msra.mxu0 0.0
  %298 = vmatprep.subr.mxu0 0.0
  %299 = vmatpush1.msra.mxu0 0.0
  %300 = vmatprep.subr.mxu0 0.0
  %v301 = vand.u32 %v36, 4294901760
  %302 = vmatpush1.msra.mxu0 %v301
  %303 = vmatprep.subr.mxu0 0.0
  %v304 = vand.u32 %v21, 4294901760
  %305 = vmatpush1.msra.mxu0 %v304
  %306 = vmatprep.subr.mxu0 0.0
  %307 = vmatpush2.msra.mxu0 0.0
  %308 = vmatprep.subr.mxu0 0.0
  %309 = vmatpush2.msra.mxu0 0.0
  %310 = vmatprep.subr.mxu0 0.0
  %311 = vmatpush2.msra.mxu0 0.0
  %312 = vmatprep.subr.mxu0 0.0
  %313 = vmatpush2.msra.mxu0 0.0
  %314 = vmatprep.subr.mxu0 0.0
  %315 = vmatpush2.msra.mxu0 0.0
  %316 = vmatprep.subr.mxu0 0.0
  %317 = vmatpush2.msra.mxu0 0.0
  %318 = vmatprep.subr.mxu0 0.0
  %319 = vmatpush2.msra.mxu0 0.0
  %320 = vmatprep.subr.mxu0 0.0
  %321 = vmatpush2.msra.mxu0 0.0
  %322 = vmatprep.subr.mxu0 0.0
  %323 = vmatpush2.msra.mxu0 0.0
  %324 = vmatprep.subr.mxu0 0.0
  %325 = vmatpush2.msra.mxu0 0.0
  %326 = vmatprep.subr.mxu0 0.0
  %327 = vmatpush2.msra.mxu0 0.0
  %328 = vmatprep.subr.mxu0 0.0
  %329 = vmatpush2.msra.mxu0 0.0
  %330 = vmatprep.subr.mxu0 0.0
  %331 = vmatpush2.msra.mxu0 0.0
  %332 = vmatprep.subr.mxu0 0.0
  %333 = vmatpush2.msra.mxu0 0.0
  %334 = vmatprep.subr.mxu0 0.0
  %335 = vmatpush2.msra.mxu0 0.0
  %336 = vmatprep.subr.mxu0 0.0
  %337 = vmatpush2.msra.mxu0 0.0
  %338 = vmatprep.mubr.f32.mxu0 0.0
  %v339 = vand.u32 %v32, 4294901760
  %v340 = vsub.f32 %v32, %v339
  %v341 = vand.u32 %v340, 4294901760
  %342 = vmatmul.mubr.f32.gmra.mxu0 %v341
  %v343 = vpop.f32.mrf.mxu0
  %v344 = vadd.f32 %v269, %v343
  %v345 = vpop.f32.mrf.mxu0
  %346 = vdwg.mxu0
  %347 = vmatprep.subr.mxu0 0.0
  %348 = vmatpush1.msra.mxu0 0.0
  %349 = vmatprep.subr.mxu0 0.0
  %350 = vmatpush1.msra.mxu0 0.0
  %351 = vmatprep.subr.mxu0 0.0
  %352 = vmatpush1.msra.mxu0 0.0
  %353 = vmatprep.subr.mxu0 0.0
  %354 = vmatpush1.msra.mxu0 0.0
  %355 = vmatprep.subr.mxu0 0.0
  %356 = vmatpush1.msra.mxu0 0.0
  %357 = vmatprep.subr.mxu0 0.0
  %358 = vmatpush1.msra.mxu0 0.0
  %359 = vmatprep.subr.mxu0 0.0
  %360 = vmatpush1.msra.mxu0 0.0
  %361 = vmatprep.subr.mxu0 0.0
  %362 = vmatpush1.msra.mxu0 0.0
  %363 = vmatprep.subr.mxu0 0.0
  %364 = vmatpush1.msra.mxu0 0.0
  %365 = vmatprep.subr.mxu0 0.0
  %366 = vmatpush1.msra.mxu0 0.0
  %367 = vmatprep.subr.mxu0 0.0
  %368 = vmatpush1.msra.mxu0 0.0
  %369 = vmatprep.subr.mxu0 0.0
  %370 = vmatpush1.msra.mxu0 0.0
  %371 = vmatprep.subr.mxu0 0.0
  %372 = vmatpush1.msra.mxu0 0.0
  %373 = vmatprep.subr.mxu0 0.0
  %374 = vmatpush1.msra.mxu0 0.0
  %375 = vmatprep.subr.mxu0 0.0
  %v376 = vand.u32 %v36, 4294901760
  %v377 = vsub.f32 %v36, %v376
  %v378 = vand.u32 %v377, 4294901760
  %379 = vmatpush1.msra.mxu0 %v378
  %380 = vmatprep.subr.mxu0 0.0
  %v381 = vand.u32 %v21, 4294901760
  %v382 = vsub.f32 %v21, %v381
  %v383 = vand.u32 %v382, 4294901760
  %384 = vmatpush1.msra.mxu0 %v383
  %385 = vmatprep.subr.mxu0 0.0
  %386 = vmatpush2.msra.mxu0 0.0
  %387 = vmatprep.subr.mxu0 0.0
  %388 = vmatpush2.msra.mxu0 0.0
  %389 = vmatprep.subr.mxu0 0.0
  %390 = vmatpush2.msra.mxu0 0.0
  %391 = vmatprep.subr.mxu0 0.0
  %392 = vmatpush2.msra.mxu0 0.0
  %393 = vmatprep.subr.mxu0 0.0
  %394 = vmatpush2.msra.mxu0 0.0
  %395 = vmatprep.subr.mxu0 0.0
  %396 = vmatpush2.msra.mxu0 0.0
  %397 = vmatprep.subr.mxu0 0.0
  %398 = vmatpush2.msra.mxu0 0.0
  %399 = vmatprep.subr.mxu0 0.0
  %400 = vmatpush2.msra.mxu0 0.0
  %401 = vmatprep.subr.mxu0 0.0
  %402 = vmatpush2.msra.mxu0 0.0
  %403 = vmatprep.subr.mxu0 0.0
  %404 = vmatpush2.msra.mxu0 0.0
  %405 = vmatprep.subr.mxu0 0.0
  %406 = vmatpush2.msra.mxu0 0.0
  %407 = vmatprep.subr.mxu0 0.0
  %408 = vmatpush2.msra.mxu0 0.0
  %409 = vmatprep.subr.mxu0 0.0
  %410 = vmatpush2.msra.mxu0 0.0
  %411 = vmatprep.subr.mxu0 0.0
  %412 = vmatpush2.msra.mxu0 0.0
  %413 = vmatprep.subr.mxu0 0.0
  %414 = vmatpush2.msra.mxu0 0.0
  %415 = vmatprep.subr.mxu0 0.0
  %416 = vmatpush2.msra.mxu0 0.0
  %417 = vmatprep.mubr.f32.mxu0 0.0
  %v418 = vand.u32 %v32, 4294901760
  %419 = vmatmul.mubr.f32.gmra.mxu0 %v418
  %v420 = vpop.f32.mrf.mxu0
  %v421 = vadd.f32 %v344, %v420
  %v422 = vpop.f32.mrf.mxu0
  %423 = vdwg.mxu0
  %424 = vmatprep.subr.mxu0 0.0
  %425 = vmatpush1.msra.mxu0 0.0
  %426 = vmatprep.subr.mxu0 0.0
  %427 = vmatpush1.msra.mxu0 0.0
  %428 = vmatprep.subr.mxu0 0.0
  %429 = vmatpush1.msra.mxu0 0.0
  %430 = vmatprep.subr.mxu0 0.0
  %431 = vmatpush1.msra.mxu0 0.0
  %432 = vmatprep.subr.mxu0 0.0
  %433 = vmatpush1.msra.mxu0 0.0
  %434 = vmatprep.subr.mxu0 0.0
  %435 = vmatpush1.msra.mxu0 0.0
  %436 = vmatprep.subr.mxu0 0.0
  %437 = vmatpush1.msra.mxu0 0.0
  %438 = vmatprep.subr.mxu0 0.0
  %439 = vmatpush1.msra.mxu0 0.0
  %440 = vmatprep.subr.mxu0 0.0
  %441 = vmatpush1.msra.mxu0 0.0
  %442 = vmatprep.subr.mxu0 0.0
  %443 = vmatpush1.msra.mxu0 0.0
  %444 = vmatprep.subr.mxu0 0.0
  %445 = vmatpush1.msra.mxu0 0.0
  %446 = vmatprep.subr.mxu0 0.0
  %447 = vmatpush1.msra.mxu0 0.0
  %448 = vmatprep.subr.mxu0 0.0
  %449 = vmatpush1.msra.mxu0 0.0
  %450 = vmatprep.subr.mxu0 0.0
  %451 = vmatpush1.msra.mxu0 0.0
  %452 = vmatprep.subr.mxu0 0.0
  %v453 = vand.u32 %v36, 4294901760
  %454 = vmatpush1.msra.mxu0 %v453
  %455 = vmatprep.subr.mxu0 0.0
  %v456 = vand.u32 %v21, 4294901760
  %457 = vmatpush1.msra.mxu0 %v456
  %458 = vmatprep.subr.mxu0 0.0
  %459 = vmatpush2.msra.mxu0 0.0
  %460 = vmatprep.subr.mxu0 0.0
  %461 = vmatpush2.msra.mxu0 0.0
  %462 = vmatprep.subr.mxu0 0.0
  %463 = vmatpush2.msra.mxu0 0.0
  %464 = vmatprep.subr.mxu0 0.0
  %465 = vmatpush2.msra.mxu0 0.0
  %466 = vmatprep.subr.mxu0 0.0
  %467 = vmatpush2.msra.mxu0 0.0
  %468 = vmatprep.subr.mxu0 0.0
  %469 = vmatpush2.msra.mxu0 0.0
  %470 = vmatprep.subr.mxu0 0.0
  %471 = vmatpush2.msra.mxu0 0.0
  %472 = vmatprep.subr.mxu0 0.0
  %473 = vmatpush2.msra.mxu0 0.0
  %474 = vmatprep.subr.mxu0 0.0
  %475 = vmatpush2.msra.mxu0 0.0
  %476 = vmatprep.subr.mxu0 0.0
  %477 = vmatpush2.msra.mxu0 0.0
  %478 = vmatprep.subr.mxu0 0.0
  %479 = vmatpush2.msra.mxu0 0.0
  %480 = vmatprep.subr.mxu0 0.0
  %481 = vmatpush2.msra.mxu0 0.0
  %482 = vmatprep.subr.mxu0 0.0
  %483 = vmatpush2.msra.mxu0 0.0
  %484 = vmatprep.subr.mxu0 0.0
  %485 = vmatpush2.msra.mxu0 0.0
  %486 = vmatprep.subr.mxu0 0.0
  %487 = vmatpush2.msra.mxu0 0.0
  %488 = vmatprep.subr.mxu0 0.0
  %489 = vmatpush2.msra.mxu0 0.0
  %490 = vmatprep.mubr.f32.mxu0 0.0
  %v491 = vand.u32 %v32, 4294901760
  %492 = vmatmul.mubr.f32.gmra.mxu0 %v491
  %v493 = vpop.f32.mrf.mxu0
  %v494 = vadd.f32 %v421, %v493
  %v495 = vpop.f32.mrf.mxu0
  %496 = vdwg.mxu0
  %v497 = vmax.f32 %v494, 0.0
  %v498 = vld [vmem:[%s3] sm:$0xff]
  %v499 = vld [vmem:[%s3 + $0x8] sm:$0xff]
  %v500 = vld [vmem:[%s3 + $0x10] sm:$0xff]
  %v501 = vld [vmem:[%s3 + $0x18] sm:$0xff]
  %v502 = vld [vmem:[%s3 + $0x20] sm:$0xff]
  %v503 = vld [vmem:[%s3 + $0x28] sm:$0xff]
  %v504 = vld [vmem:[%s3 + $0x30] sm:$0xff]
  %v505 = vld [vmem:[%s3 + $0x38] sm:$0xff]
  %v506 = vld [vmem:[%s3 + $0x40] sm:$0xff]
  %v507 = vld [vmem:[%s3 + $0x48] sm:$0xff]
  %v508 = vld [vmem:[%s3 + $0x50] sm:$0xff]
  %v509 = vld [vmem:[%s3 + $0x58] sm:$0xff]
  %v510 = vld [vmem:[%s3 + $0x60] sm:$0xff]
  %v511 = vld [vmem:[%s3 + $0x68] sm:$0xff]
  %v512 = vld [vmem:[%s3 + $0x70] sm:$0xff]
  %v513 = vld [vmem:[%s3 + $0x78] sm:$0xff]
  %v514 = vld [vmem:[%s4] sm:$0x1]
  %v516 = vlaneseq
  %v517 = vshrl.u32 %v516, 7
  %v518 = vsub.s32 0, %v517
  %v519 = vrot.slane %v514, %v518
  %521 = vmatprep.subr.mxu0 0.0
  %v522 = vand.u32 %v513, 4294901760
  %523 = vmatpush1.msra.mxu0 %v522
  %524 = vmatprep.subr.mxu0 0.0
  %v525 = vand.u32 %v512, 4294901760
  %526 = vmatpush1.msra.mxu0 %v525
  %527 = vmatprep.subr.mxu0 0.0
  %v528 = vand.u32 %v511, 4294901760
  %529 = vmatpush1.msra.mxu0 %v528
  %530 = vmatprep.subr.mxu0 0.0
  %v531 = vand.u32 %v510, 4294901760
  %532 = vmatpush1.msra.mxu0 %v531
  %533 = vmatprep.subr.mxu0 0.0
  %v534 = vand.u32 %v509, 4294901760
  %535 = vmatpush1.msra.mxu0 %v534
  %536 = vmatprep.subr.mxu0 0.0
  %v537 = vand.u32 %v508, 4294901760
  %538 = vmatpush1.msra.mxu0 %v537
  %539 = vmatprep.subr.mxu0 0.0
  %v540 = vand.u32 %v507, 4294901760
  %541 = vmatpush1.msra.mxu0 %v540
  %542 = vmatprep.subr.mxu0 0.0
  %v543 = vand.u32 %v506, 4294901760
  %544 = vmatpush1.msra.mxu0 %v543
  %545 = vmatprep.subr.mxu0 0.0
  %v546 = vand.u32 %v505, 4294901760
  %547 = vmatpush1.msra.mxu0 %v546
  %548 = vmatprep.subr.mxu0 0.0
  %v549 = vand.u32 %v504, 4294901760
  %550 = vmatpush1.msra.mxu0 %v549
  %551 = vmatprep.subr.mxu0 0.0
  %v552 = vand.u32 %v503, 4294901760
  %553 = vmatpush1.msra.mxu0 %v552
  %554 = vmatprep.subr.mxu0 0.0
  %v555 = vand.u32 %v502, 4294901760
  %556 = vmatpush1.msra.mxu0 %v555
  %557 = vmatprep.subr.mxu0 0.0
  %v558 = vand.u32 %v501, 4294901760
  %559 = vmatpush1.msra.mxu0 %v558
  %560 = vmatprep.subr.mxu0 0.0
  %v561 = vand.u32 %v500, 4294901760
  %562 = vmatpush1.msra.mxu0 %v561
  %563 = vmatprep.subr.mxu0 0.0
  %v564 = vand.u32 %v499, 4294901760
  %565 = vmatpush1.msra.mxu0 %v564
  %566 = vmatprep.subr.mxu0 0.0
  %v567 = vand.u32 %v498, 4294901760
  %568 = vmatpush1.msra.mxu0 %v567
  %569 = vmatprep.subr.mxu0 0.0
  %570 = vmatpush2.msra.mxu0 0.0
  %571 = vmatprep.subr.mxu0 0.0
  %572 = vmatpush2.msra.mxu0 0.0
  %573 = vmatprep.subr.mxu0 0.0
  %574 = vmatpush2.msra.mxu0 0.0
  %575 = vmatprep.subr.mxu0 0.0
  %576 = vmatpush2.msra.mxu0 0.0
  %577 = vmatprep.subr.mxu0 0.0
  %578 = vmatpush2.msra.mxu0 0.0
  %579 = vmatprep.subr.mxu0 0.0
  %580 = vmatpush2.msra.mxu0 0.0
  %581 = vmatprep.subr.mxu0 0.0
  %582 = vmatpush2.msra.mxu0 0.0
  %583 = vmatprep.subr.mxu0 0.0
  %584 = vmatpush2.msra.mxu0 0.0
  %585 = vmatprep.subr.mxu0 0.0
  %586 = vmatpush2.msra.mxu0 0.0
  %587 = vmatprep.subr.mxu0 0.0
  %588 = vmatpush2.msra.mxu0 0.0
  %589 = vmatprep.subr.mxu0 0.0
  %590 = vmatpush2.msra.mxu0 0.0
  %591 = vmatprep.subr.mxu0 0.0
  %592 = vmatpush2.msra.mxu0 0.0
  %593 = vmatprep.subr.mxu0 0.0
  %594 = vmatpush2.msra.mxu0 0.0
  %595 = vmatprep.subr.mxu0 0.0
  %596 = vmatpush2.msra.mxu0 0.0
  %597 = vmatprep.subr.mxu0 0.0
  %598 = vmatpush2.msra.mxu0 0.0
  %599 = vmatprep.subr.mxu0 0.0
  %600 = vmatpush2.msra.mxu0 0.0
  %601 = vmatprep.mubr.f32.mxu0 0.0
  %v602 = vand.u32 %v497, 4294901760
  %v603 = vsub.f32 %v497, %v602
  %v604 = vand.u32 %v603, 4294901760
  %v605 = vsub.f32 %v603, %v604
  %v606 = vand.u32 %v605, 4294901760
  %607 = vmatmul.mubr.f32.gmra.mxu0 %v606
  %v608 = vpop.f32.mrf.mxu0
  %v609 = vadd.f32 %v519, %v608
  %v610 = vpop.f32.mrf.mxu0
  %611 = vdwg.mxu0
  %612 = vmatprep.subr.mxu0 0.0
  %v613 = vand.u32 %v513, 4294901760
  %v614 = vsub.f32 %v513, %v613
  %v615 = vand.u32 %v614, 4294901760
  %v616 = vsub.f32 %v614, %v615
  %v617 = vand.u32 %v616, 4294901760
  %618 = vmatpush1.msra.mxu0 %v617
  %619 = vmatprep.subr.mxu0 0.0
  %v620 = vand.u32 %v512, 4294901760
  %v621 = vsub.f32 %v512, %v620
  %v622 = vand.u32 %v621, 4294901760
  %v623 = vsub.f32 %v621, %v622
  %v624 = vand.u32 %v623, 4294901760
  %625 = vmatpush1.msra.mxu0 %v624
  %626 = vmatprep.subr.mxu0 0.0
  %v627 = vand.u32 %v511, 4294901760
  %v628 = vsub.f32 %v511, %v627
  %v629 = vand.u32 %v628, 4294901760
  %v630 = vsub.f32 %v628, %v629
  %v631 = vand.u32 %v630, 4294901760
  %632 = vmatpush1.msra.mxu0 %v631
  %633 = vmatprep.subr.mxu0 0.0
  %v634 = vand.u32 %v510, 4294901760
  %v635 = vsub.f32 %v510, %v634
  %v636 = vand.u32 %v635, 4294901760
  %v637 = vsub.f32 %v635, %v636
  %v638 = vand.u32 %v637, 4294901760
  %639 = vmatpush1.msra.mxu0 %v638
  %640 = vmatprep.subr.mxu0 0.0
  %v641 = vand.u32 %v509, 4294901760
  %v642 = vsub.f32 %v509, %v641
  %v643 = vand.u32 %v642, 4294901760
  %v644 = vsub.f32 %v642, %v643
  %v645 = vand.u32 %v644, 4294901760
  %646 = vmatpush1.msra.mxu0 %v645
  %647 = vmatprep.subr.mxu0 0.0
  %v648 = vand.u32 %v508, 4294901760
  %v649 = vsub.f32 %v508, %v648
  %v650 = vand.u32 %v649, 4294901760
  %v651 = vsub.f32 %v649, %v650
  %v652 = vand.u32 %v651, 4294901760
  %653 = vmatpush1.msra.mxu0 %v652
  %654 = vmatprep.subr.mxu0 0.0
  %v655 = vand.u32 %v507, 4294901760
  %v656 = vsub.f32 %v507, %v655
  %v657 = vand.u32 %v656, 4294901760
  %v658 = vsub.f32 %v656, %v657
  %v659 = vand.u32 %v658, 4294901760
  %660 = vmatpush1.msra.mxu0 %v659
  %661 = vmatprep.subr.mxu0 0.0
  %v662 = vand.u32 %v506, 4294901760
  %v663 = vsub.f32 %v506, %v662
  %v664 = vand.u32 %v663, 4294901760
  %v665 = vsub.f32 %v663, %v664
  %v666 = vand.u32 %v665, 4294901760
  %667 = vmatpush1.msra.mxu0 %v666
  %668 = vmatprep.subr.mxu0 0.0
  %v669 = vand.u32 %v505, 4294901760
  %v670 = vsub.f32 %v505, %v669
  %v671 = vand.u32 %v670, 4294901760
  %v672 = vsub.f32 %v670, %v671
  %v673 = vand.u32 %v672, 4294901760
  %674 = vmatpush1.msra.mxu0 %v673
  %675 = vmatprep.subr.mxu0 0.0
  %v676 = vand.u32 %v504, 4294901760
  %v677 = vsub.f32 %v504, %v676
  %v678 = vand.u32 %v677, 4294901760
  %v679 = vsub.f32 %v677, %v678
  %v680 = vand.u32 %v679, 4294901760
  %681 = vmatpush1.msra.mxu0 %v680
  %682 = vmatprep.subr.mxu0 0.0
  %v683 = vand.u32 %v503, 4294901760
  %v684 = vsub.f32 %v503, %v683
  %v685 = vand.u32 %v684, 4294901760
  %v686 = vsub.f32 %v684, %v685
  %v687 = vand.u32 %v686, 4294901760
  %688 = vmatpush1.msra.mxu0 %v687
  %689 = vmatprep.subr.mxu0 0.0
  %v690 = vand.u32 %v502, 4294901760
  %v691 = vsub.f32 %v502, %v690
  %v692 = vand.u32 %v691, 4294901760
  %v693 = vsub.f32 %v691, %v692
  %v694 = vand.u32 %v693, 4294901760
  %695 = vmatpush1.msra.mxu0 %v694
  %696 = vmatprep.subr.mxu0 0.0
  %v697 = vand.u32 %v501, 4294901760
  %v698 = vsub.f32 %v501, %v697
  %v699 = vand.u32 %v698, 4294901760
  %v700 = vsub.f32 %v698, %v699
  %v701 = vand.u32 %v700, 4294901760
  %702 = vmatpush1.msra.mxu0 %v701
  %703 = vmatprep.subr.mxu0 0.0
  %v704 = vand.u32 %v500, 4294901760
  %v705 = vsub.f32 %v500, %v704
  %v706 = vand.u32 %v705, 4294901760
  %v707 = vsub.f32 %v705, %v706
  %v708 = vand.u32 %v707, 4294901760
  %709 = vmatpush1.msra.mxu0 %v708
  %710 = vmatprep.subr.mxu0 0.0
  %v711 = vand.u32 %v499, 4294901760
  %v712 = vsub.f32 %v499, %v711
  %v713 = vand.u32 %v712, 4294901760
  %v714 = vsub.f32 %v712, %v713
  %v715 = vand.u32 %v714, 4294901760
  %716 = vmatpush1.msra.mxu0 %v715
  %717 = vmatprep.subr.mxu0 0.0
  %v718 = vand.u32 %v498, 4294901760
  %v719 = vsub.f32 %v498, %v718
  %v720 = vand.u32 %v719, 4294901760
  %v721 = vsub.f32 %v719, %v720
  %v722 = vand.u32 %v721, 4294901760
  %723 = vmatpush1.msra.mxu0 %v722
  %724 = vmatprep.subr.mxu0 0.0
  %725 = vmatpush2.msra.mxu0 0.0
  %726 = vmatprep.subr.mxu0 0.0
  %727 = vmatpush2.msra.mxu0 0.0
  %728 = vmatprep.subr.mxu0 0.0
  %729 = vmatpush2.msra.mxu0 0.0
  %730 = vmatprep.subr.mxu0 0.0
  %731 = vmatpush2.msra.mxu0 0.0
  %732 = vmatprep.subr.mxu0 0.0
  %733 = vmatpush2.msra.mxu0 0.0
  %734 = vmatprep.subr.mxu0 0.0
  %735 = vmatpush2.msra.mxu0 0.0
  %736 = vmatprep.subr.mxu0 0.0
  %737 = vmatpush2.msra.mxu0 0.0
  %738 = vmatprep.subr.mxu0 0.0
  %739 = vmatpush2.msra.mxu0 0.0
  %740 = vmatprep.subr.mxu0 0.0
  %741 = vmatpush2.msra.mxu0 0.0
  %742 = vmatprep.subr.mxu0 0.0
  %743 = vmatpush2.msra.mxu0 0.0
  %744 = vmatprep.subr.mxu0 0.0
  %745 = vmatpush2.msra.mxu0 0.0
  %746 = vmatprep.subr.mxu0 0.0
  %747 = vmatpush2.msra.mxu0 0.0
  %748 = vmatprep.subr.mxu0 0.0
  %749 = vmatpush2.msra.mxu0 0.0
  %750 = vmatprep.subr.mxu0 0.0
  %751 = vmatpush2.msra.mxu0 0.0
  %752 = vmatprep.subr.mxu0 0.0
  %753 = vmatpush2.msra.mxu0 0.0
  %754 = vmatprep.subr.mxu0 0.0
  %755 = vmatpush2.msra.mxu0 0.0
  %756 = vmatprep.mubr.f32.mxu0 0.0
  %v757 = vand.u32 %v497, 4294901760
  %758 = vmatmul.mubr.f32.gmra.mxu0 %v757
  %v759 = vpop.f32.mrf.mxu0
  %v760 = vadd.f32 %v609, %v759
  %v761 = vpop.f32.mrf.mxu0
  %762 = vdwg.mxu0
  %763 = vmatprep.subr.mxu0 0.0
  %v764 = vand.u32 %v513, 4294901760
  %v765 = vsub.f32 %v513, %v764
  %766 = vmatpush1.msra.mxu0 %v765
  %767 = vmatprep.subr.mxu0 0.0
  %v768 = vand.u32 %v512, 4294901760
  %v769 = vsub.f32 %v512, %v768
  %770 = vmatpush1.msra.mxu0 %v769
  %771 = vmatprep.subr.mxu0 0.0
  %v772 = vand.u32 %v511, 4294901760
  %v773 = vsub.f32 %v511, %v772
  %774 = vmatpush1.msra.mxu0 %v773
  %775 = vmatprep.subr.mxu0 0.0
  %v776 = vand.u32 %v510, 4294901760
  %v777 = vsub.f32 %v510, %v776
  %778 = vmatpush1.msra.mxu0 %v777
  %779 = vmatprep.subr.mxu0 0.0
  %v780 = vand.u32 %v509, 4294901760
  %v781 = vsub.f32 %v509, %v780
  %782 = vmatpush1.msra.mxu0 %v781
  %783 = vmatprep.subr.mxu0 0.0
  %v784 = vand.u32 %v508, 4294901760
  %v785 = vsub.f32 %v508, %v784
  %786 = vmatpush1.msra.mxu0 %v785
  %787 = vmatprep.subr.mxu0 0.0
  %v788 = vand.u32 %v507, 4294901760
  %v789 = vsub.f32 %v507, %v788
  %790 = vmatpush1.msra.mxu0 %v789
  %791 = vmatprep.subr.mxu0 0.0
  %v792 = vand.u32 %v506, 4294901760
  %v793 = vsub.f32 %v506, %v792
  %794 = vmatpush1.msra.mxu0 %v793
  %795 = vmatprep.subr.mxu0 0.0
  %v796 = vand.u32 %v505, 4294901760
  %v797 = vsub.f32 %v505, %v796
  %798 = vmatpush1.msra.mxu0 %v797
  %799 = vmatprep.subr.mxu0 0.0
  %v800 = vand.u32 %v504, 4294901760
  %v801 = vsub.f32 %v504, %v800
  %802 = vmatpush1.msra.mxu0 %v801
  %803 = vmatprep.subr.mxu0 0.0
  %v804 = vand.u32 %v503, 4294901760
  %v805 = vsub.f32 %v503, %v804
  %806 = vmatpush1.msra.mxu0 %v805
  %807 = vmatprep.subr.mxu0 0.0
  %v808 = vand.u32 %v502, 4294901760
  %v809 = vsub.f32 %v502, %v808
  %810 = vmatpush1.msra.mxu0 %v809
  %811 = vmatprep.subr.mxu0 0.0
  %v812 = vand.u32 %v501, 4294901760
  %v813 = vsub.f32 %v501, %v812
  %814 = vmatpush1.msra.mxu0 %v813
  %815 = vmatprep.subr.mxu0 0.0
  %v816 = vand.u32 %v500, 4294901760
  %v817 = vsub.f32 %v500, %v816
  %818 = vmatpush1.msra.mxu0 %v817
  %819 = vmatprep.subr.mxu0 0.0
  %v820 = vand.u32 %v499, 4294901760
  %v821 = vsub.f32 %v499, %v820
  %822 = vmatpush1.msra.mxu0 %v821
  %823 = vmatprep.subr.mxu0 0.0
  %v824 = vand.u32 %v498, 4294901760
  %v825 = vsub.f32 %v498, %v824
  %826 = vmatpush1.msra.mxu0 %v825
  %827 = vmatprep.subr.mxu0 0.0
  %828 = vmatpush2.msra.mxu0 0.0
  %829 = vmatprep.subr.mxu0 0.0
  %830 = vmatpush2.msra.mxu0 0.0
  %831 = vmatprep.subr.mxu0 0.0
  %832 = vmatpush2.msra.mxu0 0.0
  %833 = vmatprep.subr.mxu0 0.0
  %834 = vmatpush2.msra.mxu0 0.0
  %835 = vmatprep.subr.mxu0 0.0
  %836 = vmatpush2.msra.mxu0 0.0
  %837 = vmatprep.subr.mxu0 0.0
  %838 = vmatpush2.msra.mxu0 0.0
  %839 = vmatprep.subr.mxu0 0.0
  %840 = vmatpush2.msra.mxu0 0.0
  %841 = vmatprep.subr.mxu0 0.0
  %842 = vmatpush2.msra.mxu0 0.0
  %843 = vmatprep.subr.mxu0 0.0
  %844 = vmatpush2.msra.mxu0 0.0
  %845 = vmatprep.subr.mxu0 0.0
  %846 = vmatpush2.msra.mxu0 0.0
  %847 = vmatprep.subr.mxu0 0.0
  %848 = vmatpush2.msra.mxu0 0.0
  %849 = vmatprep.subr.mxu0 0.0
  %850 = vmatpush2.msra.mxu0 0.0
  %851 = vmatprep.subr.mxu0 0.0
  %852 = vmatpush2.msra.mxu0 0.0
  %853 = vmatprep.subr.mxu0 0.0
  %854 = vmatpush2.msra.mxu0 0.0
  %855 = vmatprep.subr.mxu0 0.0
  %856 = vmatpush2.msra.mxu0 0.0
  %857 = vmatprep.subr.mxu0 0.0
  %858 = vmatpush2.msra.mxu0 0.0
  %859 = vmatprep.mubr.f32.mxu0 0.0
  %v860 = vand.u32 %v497, 4294901760
  %v861 = vsub.f32 %v497, %v860
  %862 = vmatmul.mubr.f32.gmra.mxu0 %v861
  %v863 = vpop.f32.mrf.mxu0
  %v864 = vadd.f32 %v760, %v863
  %v865 = vpop.f32.mrf.mxu0
  %866 = vdwg.mxu0
  %867 = vmatprep.subr.mxu0 0.0
  %v868 = vand.u32 %v513, 4294901760
  %869 = vmatpush1.msra.mxu0 %v868
  %870 = vmatprep.subr.mxu0 0.0
  %v871 = vand.u32 %v512, 4294901760
  %872 = vmatpush1.msra.mxu0 %v871
  %873 = vmatprep.subr.mxu0 0.0
  %v874 = vand.u32 %v511, 4294901760
  %875 = vmatpush1.msra.mxu0 %v874
  %876 = vmatprep.subr.mxu0 0.0
  %v877 = vand.u32 %v510, 4294901760
  %878 = vmatpush1.msra.mxu0 %v877
  %879 = vmatprep.subr.mxu0 0.0
  %v880 = vand.u32 %v509, 4294901760
  %881 = vmatpush1.msra.mxu0 %v880
  %882 = vmatprep.subr.mxu0 0.0
  %v883 = vand.u32 %v508, 4294901760
  %884 = vmatpush1.msra.mxu0 %v883
  %885 = vmatprep.subr.mxu0 0.0
  %v886 = vand.u32 %v507, 4294901760
  %887 = vmatpush1.msra.mxu0 %v886
  %888 = vmatprep.subr.mxu0 0.0
  %v889 = vand.u32 %v506, 4294901760
  %890 = vmatpush1.msra.mxu0 %v889
  %891 = vmatprep.subr.mxu0 0.0
  %v892 = vand.u32 %v505, 4294901760
  %893 = vmatpush1.msra.mxu0 %v892
  %894 = vmatprep.subr.mxu0 0.0
  %v895 = vand.u32 %v504, 4294901760
  %896 = vmatpush1.msra.mxu0 %v895
  %897 = vmatprep.subr.mxu0 0.0
  %v898 = vand.u32 %v503, 4294901760
  %899 = vmatpush1.msra.mxu0 %v898
  %900 = vmatprep.subr.mxu0 0.0
  %v901 = vand.u32 %v502, 4294901760
  %902 = vmatpush1.msra.mxu0 %v901
  %903 = vmatprep.subr.mxu0 0.0
  %v904 = vand.u32 %v501, 4294901760
  %905 = vmatpush1.msra.mxu0 %v904
  %906 = vmatprep.subr.mxu0 0.0
  %v907 = vand.u32 %v500, 4294901760
  %908 = vmatpush1.msra.mxu0 %v907
  %909 = vmatprep.subr.mxu0 0.0
  %v910 = vand.u32 %v499, 4294901760
  %911 = vmatpush1.msra.mxu0 %v910
  %912 = vmatprep.subr.mxu0 0.0
  %v913 = vand.u32 %v498, 4294901760
  %914 = vmatpush1.msra.mxu0 %v913
  %915 = vmatprep.subr.mxu0 0.0
  %916 = vmatpush2.msra.mxu0 0.0
  %917 = vmatprep.subr.mxu0 0.0
  %918 = vmatpush2.msra.mxu0 0.0
  %919 = vmatprep.subr.mxu0 0.0
  %920 = vmatpush2.msra.mxu0 0.0
  %921 = vmatprep.subr.mxu0 0.0
  %922 = vmatpush2.msra.mxu0 0.0
  %923 = vmatprep.subr.mxu0 0.0
  %924 = vmatpush2.msra.mxu0 0.0
  %925 = vmatprep.subr.mxu0 0.0
  %926 = vmatpush2.msra.mxu0 0.0
  %927 = vmatprep.subr.mxu0 0.0
  %928 = vmatpush2.msra.mxu0 0.0
  %929 = vmatprep.subr.mxu0 0.0
  %930 = vmatpush2.msra.mxu0 0.0
  %931 = vmatprep.subr.mxu0 0.0
  %932 = vmatpush2.msra.mxu0 0.0
  %933 = vmatprep.subr.mxu0 0.0
  %934 = vmatpush2.msra.mxu0 0.0
  %935 = vmatprep.subr.mxu0 0.0
  %936 = vmatpush2.msra.mxu0 0.0
  %937 = vmatprep.subr.mxu0 0.0
  %938 = vmatpush2.msra.mxu0 0.0
  %939 = vmatprep.subr.mxu0 0.0
  %940 = vmatpush2.msra.mxu0 0.0
  %941 = vmatprep.subr.mxu0 0.0
  %942 = vmatpush2.msra.mxu0 0.0
  %943 = vmatprep.subr.mxu0 0.0
  %944 = vmatpush2.msra.mxu0 0.0
  %945 = vmatprep.subr.mxu0 0.0
  %946 = vmatpush2.msra.mxu0 0.0
  %947 = vmatprep.mubr.f32.mxu0 0.0
  %v948 = vand.u32 %v497, 4294901760
  %v949 = vsub.f32 %v497, %v948
  %v950 = vand.u32 %v949, 4294901760
  %951 = vmatmul.mubr.f32.gmra.mxu0 %v950
  %v952 = vpop.f32.mrf.mxu0
  %v953 = vadd.f32 %v864, %v952
  %v954 = vpop.f32.mrf.mxu0
  %955 = vdwg.mxu0
  %956 = vmatprep.subr.mxu0 0.0
  %v957 = vand.u32 %v513, 4294901760
  %v958 = vsub.f32 %v513, %v957
  %v959 = vand.u32 %v958, 4294901760
  %960 = vmatpush1.msra.mxu0 %v959
  %961 = vmatprep.subr.mxu0 0.0
  %v962 = vand.u32 %v512, 4294901760
  %v963 = vsub.f32 %v512, %v962
  %v964 = vand.u32 %v963, 4294901760
  %965 = vmatpush1.msra.mxu0 %v964
  %966 = vmatprep.subr.mxu0 0.0
  %v967 = vand.u32 %v511, 4294901760
  %v968 = vsub.f32 %v511, %v967
  %v969 = vand.u32 %v968, 4294901760
  %970 = vmatpush1.msra.mxu0 %v969
  %971 = vmatprep.subr.mxu0 0.0
  %v972 = vand.u32 %v510, 4294901760
  %v973 = vsub.f32 %v510, %v972
  %v974 = vand.u32 %v973, 4294901760
  %975 = vmatpush1.msra.mxu0 %v974
  %976 = vmatprep.subr.mxu0 0.0
  %v977 = vand.u32 %v509, 4294901760
  %v978 = vsub.f32 %v509, %v977
  %v979 = vand.u32 %v978, 4294901760
  %980 = vmatpush1.msra.mxu0 %v979
  %981 = vmatprep.subr.mxu0 0.0
  %v982 = vand.u32 %v508, 4294901760
  %v983 = vsub.f32 %v508, %v982
  %v984 = vand.u32 %v983, 4294901760
  %985 = vmatpush1.msra.mxu0 %v984
  %986 = vmatprep.subr.mxu0 0.0
  %v987 = vand.u32 %v507, 4294901760
  %v988 = vsub.f32 %v507, %v987
  %v989 = vand.u32 %v988, 4294901760
  %990 = vmatpush1.msra.mxu0 %v989
  %991 = vmatprep.subr.mxu0 0.0
  %v992 = vand.u32 %v506, 4294901760
  %v993 = vsub.f32 %v506, %v992
  %v994 = vand.u32 %v993, 4294901760
  %995 = vmatpush1.msra.mxu0 %v994
  %996 = vmatprep.subr.mxu0 0.0
  %v997 = vand.u32 %v505, 4294901760
  %v998 = vsub.f32 %v505, %v997
  %v999 = vand.u32 %v998, 4294901760
  %1000 = vmatpush1.msra.mxu0 %v999
  %1001 = vmatprep.subr.mxu0 0.0
  %v1002 = vand.u32 %v504, 4294901760
  %v1003 = vsub.f32 %v504, %v1002
  %v1004 = vand.u32 %v1003, 4294901760
  %1005 = vmatpush1.msra.mxu0 %v1004
  %1006 = vmatprep.subr.mxu0 0.0
  %v1007 = vand.u32 %v503, 4294901760
  %v1008 = vsub.f32 %v503, %v1007
  %v1009 = vand.u32 %v1008, 4294901760
  %1010 = vmatpush1.msra.mxu0 %v1009
  %1011 = vmatprep.subr.mxu0 0.0
  %v1012 = vand.u32 %v502, 4294901760
  %v1013 = vsub.f32 %v502, %v1012
  %v1014 = vand.u32 %v1013, 4294901760
  %1015 = vmatpush1.msra.mxu0 %v1014
  %1016 = vmatprep.subr.mxu0 0.0
  %v1017 = vand.u32 %v501, 4294901760
  %v1018 = vsub.f32 %v501, %v1017
  %v1019 = vand.u32 %v1018, 4294901760
  %1020 = vmatpush1.msra.mxu0 %v1019
  %1021 = vmatprep.subr.mxu0 0.0
  %v1022 = vand.u32 %v500, 4294901760
  %v1023 = vsub.f32 %v500, %v1022
  %v1024 = vand.u32 %v1023, 4294901760
  %1025 = vmatpush1.msra.mxu0 %v1024
  %1026 = vmatprep.subr.mxu0 0.0
  %v1027 = vand.u32 %v499, 4294901760
  %v1028 = vsub.f32 %v499, %v1027
  %v1029 = vand.u32 %v1028, 4294901760
  %1030 = vmatpush1.msra.mxu0 %v1029
  %1031 = vmatprep.subr.mxu0 0.0
  %v1032 = vand.u32 %v498, 4294901760
  %v1033 = vsub.f32 %v498, %v1032
  %v1034 = vand.u32 %v1033, 4294901760
  %1035 = vmatpush1.msra.mxu0 %v1034
  %1036 = vmatprep.subr.mxu0 0.0
  %1037 = vmatpush2.msra.mxu0 0.0
  %1038 = vmatprep.subr.mxu0 0.0
  %1039 = vmatpush2.msra.mxu0 0.0
  %1040 = vmatprep.subr.mxu0 0.0
  %1041 = vmatpush2.msra.mxu0 0.0
  %1042 = vmatprep.subr.mxu0 0.0
  %1043 = vmatpush2.msra.mxu0 0.0
  %1044 = vmatprep.subr.mxu0 0.0
  %1045 = vmatpush2.msra.mxu0 0.0
  %1046 = vmatprep.subr.mxu0 0.0
  %1047 = vmatpush2.msra.mxu0 0.0
  %1048 = vmatprep.subr.mxu0 0.0
  %1049 = vmatpush2.msra.mxu0 0.0
  %1050 = vmatprep.subr.mxu0 0.0
  %1051 = vmatpush2.msra.mxu0 0.0
  %1052 = vmatprep.subr.mxu0 0.0
  %1053 = vmatpush2.msra.mxu0 0.0
  %1054 = vmatprep.subr.mxu0 0.0
  %1055 = vmatpush2.msra.mxu0 0.0
  %1056 = vmatprep.subr.mxu0 0.0
  %1057 = vmatpush2.msra.mxu0 0.0
  %1058 = vmatprep.subr.mxu0 0.0
  %1059 = vmatpush2.msra.mxu0 0.0
  %1060 = vmatprep.subr.mxu0 0.0
  %1061 = vmatpush2.msra.mxu0 0.0
  %1062 = vmatprep.subr.mxu0 0.0
  %1063 = vmatpush2.msra.mxu0 0.0
  %1064 = vmatprep.subr.mxu0 0.0
  %1065 = vmatpush2.msra.mxu0 0.0
  %1066 = vmatprep.subr.mxu0 0.0
  %1067 = vmatpush2.msra.mxu0 0.0
  %1068 = vmatprep.mubr.f32.mxu0 0.0
  %v1069 = vand.u32 %v497, 4294901760
  %1070 = vmatmul.mubr.f32.gmra.mxu0 %v1069
  %v1071 = vpop.f32.mrf.mxu0
  %v1072 = vadd.f32 %v953, %v1071
  %v1073 = vpop.f32.mrf.mxu0
  %1074 = vdwg.mxu0
  %1075 = vmatprep.subr.mxu0 0.0
  %v1076 = vand.u32 %v513, 4294901760
  %1077 = vmatpush1.msra.mxu0 %v1076
  %1078 = vmatprep.subr.mxu0 0.0
  %v1079 = vand.u32 %v512, 4294901760
  %1080 = vmatpush1.msra.mxu0 %v1079
  %1081 = vmatprep.subr.mxu0 0.0
  %v1082 = vand.u32 %v511, 4294901760
  %1083 = vmatpush1.msra.mxu0 %v1082
  %1084 = vmatprep.subr.mxu0 0.0
  %v1085 = vand.u32 %v510, 4294901760
  %1086 = vmatpush1.msra.mxu0 %v1085
  %1087 = vmatprep.subr.mxu0 0.0
  %v1088 = vand.u32 %v509, 4294901760
  %1089 = vmatpush1.msra.mxu0 %v1088
  %1090 = vmatprep.subr.mxu0 0.0
  %v1091 = vand.u32 %v508, 4294901760
  %1092 = vmatpush1.msra.mxu0 %v1091
  %1093 = vmatprep.subr.mxu0 0.0
  %v1094 = vand.u32 %v507, 4294901760
  %1095 = vmatpush1.msra.mxu0 %v1094
  %1096 = vmatprep.subr.mxu0 0.0
  %v1097 = vand.u32 %v506, 4294901760
  %1098 = vmatpush1.msra.mxu0 %v1097
  %1099 = vmatprep.subr.mxu0 0.0
  %v1100 = vand.u32 %v505, 4294901760
  %1101 = vmatpush1.msra.mxu0 %v1100
  %1102 = vmatprep.subr.mxu0 0.0
  %v1103 = vand.u32 %v504, 4294901760
  %1104 = vmatpush1.msra.mxu0 %v1103
  %1105 = vmatprep.subr.mxu0 0.0
  %v1106 = vand.u32 %v503, 4294901760
  %1107 = vmatpush1.msra.mxu0 %v1106
  %1108 = vmatprep.subr.mxu0 0.0
  %v1109 = vand.u32 %v502, 4294901760
  %1110 = vmatpush1.msra.mxu0 %v1109
  %1111 = vmatprep.subr.mxu0 0.0
  %v1112 = vand.u32 %v501, 4294901760
  %1113 = vmatpush1.msra.mxu0 %v1112
  %1114 = vmatprep.subr.mxu0 0.0
  %v1115 = vand.u32 %v500, 4294901760
  %1116 = vmatpush1.msra.mxu0 %v1115
  %1117 = vmatprep.subr.mxu0 0.0
  %v1118 = vand.u32 %v499, 4294901760
  %1119 = vmatpush1.msra.mxu0 %v1118
  %1120 = vmatprep.subr.mxu0 0.0
  %v1121 = vand.u32 %v498, 4294901760
  %1122 = vmatpush1.msra.mxu0 %v1121
  %1123 = vmatprep.subr.mxu0 0.0
  %1124 = vmatpush2.msra.mxu0 0.0
  %1125 = vmatprep.subr.mxu0 0.0
  %1126 = vmatpush2.msra.mxu0 0.0
  %1127 = vmatprep.subr.mxu0 0.0
  %1128 = vmatpush2.msra.mxu0 0.0
  %1129 = vmatprep.subr.mxu0 0.0
  %1130 = vmatpush2.msra.mxu0 0.0
  %1131 = vmatprep.subr.mxu0 0.0
  %1132 = vmatpush2.msra.mxu0 0.0
  %1133 = vmatprep.subr.mxu0 0.0
  %1134 = vmatpush2.msra.mxu0 0.0
  %1135 = vmatprep.subr.mxu0 0.0
  %1136 = vmatpush2.msra.mxu0 0.0
  %1137 = vmatprep.subr.mxu0 0.0
  %1138 = vmatpush2.msra.mxu0 0.0
  %1139 = vmatprep.subr.mxu0 0.0
  %1140 = vmatpush2.msra.mxu0 0.0
  %1141 = vmatprep.subr.mxu0 0.0
  %1142 = vmatpush2.msra.mxu0 0.0
  %1143 = vmatprep.subr.mxu0 0.0
  %1144 = vmatpush2.msra.mxu0 0.0
  %1145 = vmatprep.subr.mxu0 0.0
  %1146 = vmatpush2.msra.mxu0 0.0
  %1147 = vmatprep.subr.mxu0 0.0
  %1148 = vmatpush2.msra.mxu0 0.0
  %1149 = vmatprep.subr.mxu0 0.0
  %1150 = vmatpush2.msra.mxu0 0.0
  %1151 = vmatprep.subr.mxu0 0.0
  %1152 = vmatpush2.msra.mxu0 0.0
  %1153 = vmatprep.subr.mxu0 0.0
  %1154 = vmatpush2.msra.mxu0 0.0
  %1155 = vmatprep.mubr.f32.mxu0 0.0
  %v1156 = vand.u32 %v497, 4294901760
  %1157 = vmatmul.mubr.f32.gmra.mxu0 %v1156
  %v1158 = vpop.f32.mrf.mxu0
  %v1159 = vadd.f32 %v1072, %v1158
  %v1160 = vpop.f32.mrf.mxu0
  %1161 = vdwg.mxu0
  %vm1162 = vcmask 23552
  %v1163 = vsel %vm1162, %v1159, -inf
  %1164 = vmax.xlane.f32.xlu0 %v1163
  %v1165 = vpop.xlane.xlu0 %1164
  %v1166 = vsub.f32 %v1159, %v1165
  %v1167 = vmul.f32 %v1166, 1.442695
  %v1168 = vpow.pop %v1167
  %v1169 = vsel %vm1162, %v1168, 0.0
  %1170 = vadd.xlane.f32.xlu0 %v1169
  %v1171 = vpop.xlane.xlu0 %1170
  %v1172 = vrcp.pop %v1171
  %v1173 = vmul.f32 %v1168, %v1172
  %1174 = vst.msk [vmem:[%s5] sm:$0xff] %vm1162, %v1173
  // Predicated region
  $region22: #{tpu_custom_call.1} parent=0 // pred_check
    _
  $region23: #{tpu_custom_call.1} parent=0 // pred_check_branch
    %1176 = sbr.rel (0) target = $region25
  $region24: #{tpu_custom_call.1} parent=0 // pred_region
    _
  $region25: #{tpu_custom_call.1} parent=0 // pred_fallthru
    _
  // Predicated region
  $region26: #{tpu_custom_call.1} parent=0 // pred_check
    _
  $region27: #{tpu_custom_call.1} parent=0 // pred_check_branch
    %1178 = sbr.rel (0) target = $region29
  $region28: #{tpu_custom_call.1} parent=0 // pred_region
    _
  $region29: #{tpu_custom_call.1} parent=0 // pred_fallthru
    _

</llo_original>
